<compile_context>
chip_gen: v5e
topology: v5e:2x2
jax: 0.10.0
libtpu: 0.0.40
codegen_flags: <defaults>
</compile_context>

<pallas_src>
import functools
import math

import jax
import jax.numpy as jnp
from jax.experimental import pallas as pl
from jax.experimental.pallas import tpu as pltpu

_NEG_BIG = -1e30                    # mask value for padded logit lanes
_VMEM_LIMIT = 48 * 1024 * 1024      # > default scoped limit, < v7x physical 64 MiB


def _round_up(v, m):
    return (v + m - 1) // m * m


def _log_softmax_masked(out, n_class):
    """Row-wise log_softmax over the first n_class columns (rest are padding)."""
    col = jax.lax.broadcasted_iota(jnp.int32, out.shape, 1)
    out = jnp.where(col < n_class, out, _NEG_BIG)
    m = jnp.max(out, axis=1, keepdims=True)
    s = out - m
    return s - jnp.log(jnp.sum(jnp.exp(s), axis=1, keepdims=True))


# -----------------------------------------------------------------------------
# Fused path: whole network in one kernel (small graphs, everything in VMEM).
# -----------------------------------------------------------------------------
def _fused_kernel(*refs, num_layers, n_class, f_pads):
    x_ref, adj_ref, invdeg_ref = refs[0], refs[1], refs[2]
    w_refs = refs[3:3 + num_layers]
    b_refs = refs[3 + num_layers:3 + 2 * num_layers]
    o_ref = refs[3 + 2 * num_layers]

    adj = adj_ref[...]                  # (n_pad, n_pad) bf16, 0/1 exact
    inv_deg = invdeg_ref[...]           # (n_pad, 1) f32
    h = x_ref[...]                      # (n_pad, f_pads[0]) f32

    for layer in range(num_layers):
        fop = f_pads[layer + 1]
        w_cat = w_refs[layer][...]      # (f_in_pad, 2*fop) bf16: [W_self | W_neigh]
        bias = b_refs[layer][...]       # (1, fop) f32

        # One fused projection (wide RHS -> better MXU fill), f32 accumulation.
        hw = jnp.dot(h.astype(jnp.bfloat16), w_cat,
                     preferred_element_type=jnp.float32)
        hw_self = hw[:, :fop]
        hw_neigh = hw[:, fop:]

        # Mean aggregation with 1/deg folded into the (N, F) result (adj is
        # never row-scaled -> no second N x N live value, 0/1 stays exact).
        agg = jnp.dot(adj, hw_neigh.astype(jnp.bfloat16),
                      preferred_element_type=jnp.float32)
        out = hw_self + inv_deg * agg + bias

        if layer < num_layers - 1:
            h = jnp.maximum(out, 0.0)   # ReLU; dropout is identity in eval mode
        else:
            h = _log_softmax_masked(out, n_class)

    o_ref[...] = h.astype(o_ref.dtype)


# -----------------------------------------------------------------------------
# Tiled path: one kernel per layer, (row_block, neighbor_block) grid over adj.
# -----------------------------------------------------------------------------
def _layer_tiled_kernel(h_self_ref, h_nb_ref, adj_ref, invdeg_ref, w_ref, b_ref,
                        o_ref, acc_ref, *, last_layer, n_class, f_in_pad):
    k = pl.program_id(1)

    @pl.when(k == 0)
    def _init():
        acc_ref[...] = jnp.zeros_like(acc_ref)

    # Accumulate neighbor sums for this row block: adj(TM,TK) @ h(TK, f_in_pad).
    acc_ref[...] += jnp.dot(adj_ref[...], h_nb_ref[...].astype(jnp.bfloat16),
                            preferred_element_type=jnp.float32)

    @pl.when(k == pl.num_programs(1) - 1)
    def _finalize():
        w = w_ref[...]                                    # (2*f_in_pad, fop) bf16
        agg = (invdeg_ref[...] * acc_ref[...]).astype(jnp.bfloat16)
        h_self = h_self_ref[...].astype(jnp.bfloat16)
        out = (jnp.dot(h_self, w[:f_in_pad], preferred_element_type=jnp.float32)
               + jnp.dot(agg, w[f_in_pad:], preferred_element_type=jnp.float32)
               + b_ref[...])
        if last_layer:
            out = _log_softmax_masked(out, n_class)
        else:
            out = jnp.maximum(out, 0.0)                   # eval-mode dropout = id
        o_ref[...] = out.astype(o_ref.dtype)


# -----------------------------------------------------------------------------
# Wrappers.
# -----------------------------------------------------------------------------
def _pad_inputs(x, adj):
    n, f0 = x.shape
    n_pad = _round_up(n, 128)                 # lane dim of adj / MXU K dim
    adj_pad = jnp.zeros((n_pad, n_pad), jnp.float32).at[:n, :n].set(adj)
    deg = jnp.sum(adj_pad, axis=1, keepdims=True)
    inv_deg = 1.0 / jnp.where(deg == 0.0, 1.0, deg)       # f32; never pre-scale adj
    # TODO(synk): on v7x adj could be fp8 (0/1 exact) for another 2x VMEM/DMA
    # saving; kept bf16 for portability to v5e/v6e.
    adj_bf16 = adj_pad.astype(jnp.bfloat16)               # 0/1 exact in bf16
    x_pad = jnp.zeros((n_pad, _round_up(f0, 128)), jnp.float32).at[:n, :f0].set(x)
    return x_pad, adj_bf16, inv_deg, n_pad


def _forward_fused(x, adj, params):
    n, f0 = x.shape
    num_layers = len(params)
    f_dims = [f0] + [w.shape[1] for w, _ in params]
    f_pads = [_round_up(d, 128) for d in f_dims]          # per-layer padding
    n_class = f_dims[-1]

    x_pad, adj_bf16, inv_deg, n_pad = _pad_inputs(x, adj)

    w_cats, biases = [], []
    for l, (w, b) in enumerate(params):
        fi, fo = w.shape[0] // 2, w.shape[1]
        fip, fop = f_pads[l], f_pads[l + 1]
        wc = jnp.zeros((fip, 2 * fop), jnp.float32)
        wc = wc.at[:fi, :fo].set(w[:fi])                  # W_self -> cols [0, fop)
        wc = wc.at[:fi, fop:fop + fo].set(w[fi:])         # W_neigh -> cols [fop, 2fop)
        w_cats.append(wc.astype(jnp.bfloat16))
        biases.append(jnp.zeros((1, fop), jnp.float32).at[0, :fo].set(b))

    kernel = functools.partial(_fused_kernel, num_layers=num_layers,
                               n_class=n_class, f_pads=tuple(f_pads))
    full = lambda shape: pl.BlockSpec(shape, lambda i: (0,) * len(shape))

    in_specs = ([full((n_pad, f_pads[0])),       # x
                 full((n_pad, n_pad)),           # adj (bf16)
                 full((n_pad, 1))]               # 1/deg
                + [full(w.shape) for w in w_cats]
                + [full(b.shape) for b in biases])

    out = pl.pallas_call(
        kernel,
        out_shape=jax.ShapeDtypeStruct((n_pad, f_pads[-1]), jnp.float32),
        grid=(1,),
        in_specs=in_specs,
        out_specs=full((n_pad, f_pads[-1])),
        compiler_params=pltpu.CompilerParams(vmem_limit_bytes=_VMEM_LIMIT),
    )(x_pad, adj_bf16, inv_deg, *w_cats, *biases)
    return out[:n, :n_class]


def _forward_tiled(x, adj, params):
    n, f0 = x.shape
    num_layers = len(params)
    f_dims = [f0] + [w.shape[1] for w, _ in params]
    f_pads = [_round_up(d, 128) for d in f_dims]
    n_class = f_dims[-1]

    h, adj_bf16, inv_deg, n_pad = _pad_inputs(x, adj)
    tile = max(t for t in (512, 256, 128) if n_pad % t == 0)
    tm = tk = tile

    for l, (w, b) in enumerate(params):
        fi, fo = w.shape[0] // 2, w.shape[1]
        fip, fop = f_pads[l], f_pads[l + 1]
        w_stack = jnp.zeros((2 * fip, fop), jnp.float32)
        w_stack = w_stack.at[:fi, :fo].set(w[:fi])              # W_self rows
        w_stack = w_stack.at[fip:fip + fi, :fo].set(w[fi:])     # W_neigh rows
        w_stack = w_stack.astype(jnp.bfloat16)
        bias = jnp.zeros((1, fop), jnp.float32).at[0, :fo].set(b)

        kernel = functools.partial(_layer_tiled_kernel,
                                   last_layer=(l == num_layers - 1),
                                   n_class=n_class, f_in_pad=fip)
        h = pl.pallas_call(
            kernel,
            out_shape=jax.ShapeDtypeStruct((n_pad, fop), jnp.float32),
            grid_spec=pltpu.PrefetchScalarGridSpec(
                num_scalar_prefetch=0,
                grid=(n_pad // tm, n_pad // tk),
                in_specs=[
                    pl.BlockSpec((tm, fip), lambda i, k: (i, 0)),    # h (self rows)
                    pl.BlockSpec((tk, fip), lambda i, k: (k, 0)),    # h (neighbor rows)
                    pl.BlockSpec((tm, tk), lambda i, k: (i, k)),     # adj tile (bf16)
                    pl.BlockSpec((tm, 1), lambda i, k: (i, 0)),      # 1/deg
                    pl.BlockSpec((2 * fip, fop), lambda i, k: (0, 0)),
                    pl.BlockSpec((1, fop), lambda i, k: (0, 0)),
                ],
                out_specs=pl.BlockSpec((tm, fop), lambda i, k: (i, 0)),
                scratch_shapes=[pltpu.VMEM((tm, fip), jnp.float32)],
            ),
            compiler_params=pltpu.CompilerParams(
                dimension_semantics=("parallel", "arbitrary"),
                vmem_limit_bytes=_VMEM_LIMIT),
        )(h, h, adj_bf16, inv_deg, w_stack, bias)

    return h[:n, :n_class]


def graphsage_forward(x, adj, params, dropout=0.5, max_fused_nodes=1024):
    """GraphSAGE forward (eval mode): hidden layers relu(conv), final log_softmax."""
    # TODO(synk): training-mode stochastic dropout not implemented (eval-mode identity).
    del dropout
    if _round_up(x.shape[0], 128) <= max_fused_nodes:
        return _forward_fused(x, adj, params)
    return _forward_tiled(x, adj, params)


# -----------------------------------------------------------------------------
# Parameter init + pure-JAX reference (mirrors the PyTorch module, eval mode).
# -----------------------------------------------------------------------------
def init_graphsage_params(key, n_feat, n_hids, n_class):
    layer_units = [n_feat] + list(n_hids)
    dims = [(layer_units[i], layer_units[i + 1]) for i in range(len(layer_units) - 1)]
    dims.append((layer_units[-1], n_class))
    params = []
    for (fi, fo) in dims:
        key, kw, kb = jax.random.split(key, 3)
        stdv = 1.0 / math.sqrt(fo)
        w = jax.random.uniform(kw, (2 * fi, fo), jnp.float32, -stdv, stdv)
        b = jax.random.uniform(kb, (fo,), jnp.float32, -stdv, stdv)
        params.append((w, b))
    return params


def _reference_forward(x, adj, params):
    def conv(h, w, b):
        neighbors = adj @ h
        deg = jnp.sum(adj, axis=1, keepdims=True)
        deg = jnp.where(deg == 0.0, 1.0, deg)
        agg = neighbors / deg
        return jnp.concatenate([h, agg], axis=1) @ w + b

    for (w, b) in params[:-1]:
        x = jax.nn.relu(conv(x, w, b))
    w, b = params[-1]
    return jax.nn.log_softmax(conv(x, w, b), axis=1)


if __name__ == "__main__":
    key = jax.random.PRNGKey(0)

    # ---- test 1: small graph -> whole-network fused kernel -------------------
    k_x, k_adj, k_p, key = jax.random.split(key, 4)
    N, n_feat, n_hids, n_class = 16, 16, [32], 8
    x = jax.random.normal(k_x, (N, n_feat), dtype=jnp.float32)
    adj = (jax.random.uniform(k_adj, (N, N)) < 0.3).astype(jnp.float32)
    adj = jnp.maximum(adj, jnp.eye(N, dtype=jnp.float32))
    params = init_graphsage_params(k_p, n_feat, n_hids, n_class)

    out = jax.block_until_ready(graphsage_forward(x, adj, params))
    assert out.shape == (N, n_class)
    assert jnp.allclose(jnp.sum(jnp.exp(out), axis=1), 1.0, atol=1e-3)
    ref = _reference_forward(x, adj, params)
    # bf16 MXU operands (f32 accumulation) -> loosened tolerance vs f32 reference.
    assert jnp.allclose(out, ref, atol=5e-2, rtol=5e-2), float(jnp.max(jnp.abs(out - ref)))

    # ---- test 2: larger graph -> tiled (row, neighbor)-grid path -------------
    k_x, k_adj, k_p, key = jax.random.split(key, 4)
    N2, n_feat2, n_hids2, n_class2 = 300, 48, [64], 10
    x2 = jax.random.normal(k_x, (N2, n_feat2), dtype=jnp.float32)
    adj2 = (jax.random.uniform(k_adj, (N2, N2)) < 0.05).astype(jnp.float32)
    adj2 = jnp.maximum(adj2, jnp.eye(N2, dtype=jnp.float32))
    params2 = init_graphsage_params(k_p, n_feat2, n_hids2, n_class2)

    out2 = jax.block_until_ready(
        graphsage_forward(x2, adj2, params2, max_fused_nodes=0))  # force tiled path
    assert out2.shape == (N2, n_class2)
    assert jnp.allclose(jnp.sum(jnp.exp(out2), axis=1), 1.0, atol=1e-3)
    ref2 = _reference_forward(x2, adj2, params2)
    assert jnp.allclose(out2, ref2, atol=5e-2, rtol=5e-2), float(jnp.max(jnp.abs(out2 - ref2)))

    print("KERNEL_OK")
</pallas_src>

<mosaic_0001>
module attributes {stable_mosaic.version = 11 : i64} {
  func.func @_fused_kernel(%arg0: i32, %arg1: memref<128x128xf32, #tpu.memory_space<vmem>>, %arg2: memref<128x128xbf16, #tpu.memory_space<vmem>>, %arg3: memref<128x1xf32, #tpu.memory_space<vmem>>, %arg4: memref<128x256xbf16, #tpu.memory_space<vmem>>, %arg5: memref<128x256xbf16, #tpu.memory_space<vmem>>, %arg6: memref<1x128xf32, #tpu.memory_space<vmem>>, %arg7: memref<1x128xf32, #tpu.memory_space<vmem>>, %arg8: memref<128x128xf32, #tpu.memory_space<vmem>>) attributes {dimension_semantics = [#tpu.dimension_semantics<arbitrary>], iteration_bounds = array<i64: 1>, scalar_prefetch = 0 : i64, scratch_operands = 0 : i64, tpu.core_type = #tpu.core_type<tc>, window_params = [{pipeline_mode = #tpu.pipeline_mode<synchronous>, transform_indices = @transform_0, window_bounds = array<i64: 128, 128>}, {pipeline_mode = #tpu.pipeline_mode<synchronous>, transform_indices = @transform_1, window_bounds = array<i64: 128, 128>}, {pipeline_mode = #tpu.pipeline_mode<synchronous>, transform_indices = @transform_2, window_bounds = array<i64: 128, 1>}, {pipeline_mode = #tpu.pipeline_mode<synchronous>, transform_indices = @transform_3, window_bounds = array<i64: 128, 256>}, {pipeline_mode = #tpu.pipeline_mode<synchronous>, transform_indices = @transform_4, window_bounds = array<i64: 128, 256>}, {pipeline_mode = #tpu.pipeline_mode<synchronous>, transform_indices = @transform_5, window_bounds = array<i64: 1, 128>}, {pipeline_mode = #tpu.pipeline_mode<synchronous>, transform_indices = @transform_6, window_bounds = array<i64: 1, 128>}, {pipeline_mode = #tpu.pipeline_mode<synchronous>, transform_indices = @transform_7, window_bounds = array<i64: 128, 128>}]} {
    %c0 = arith.constant 0 : index
    %c0_0 = arith.constant 0 : index
    %0 = vector.load %arg2[%c0, %c0_0] : memref<128x128xbf16, #tpu.memory_space<vmem>>, vector<128x128xbf16>
    %c0_1 = arith.constant 0 : index
    %c0_2 = arith.constant 0 : index
    %1 = vector.load %arg3[%c0_1, %c0_2] : memref<128x1xf32, #tpu.memory_space<vmem>>, vector<128x1xf32>
    %c0_3 = arith.constant 0 : index
    %c0_4 = arith.constant 0 : index
    %2 = vector.load %arg1[%c0_3, %c0_4] : memref<128x128xf32, #tpu.memory_space<vmem>>, vector<128x128xf32>
    %c0_5 = arith.constant 0 : index
    %c0_6 = arith.constant 0 : index
    %3 = vector.load %arg4[%c0_5, %c0_6] : memref<128x256xbf16, #tpu.memory_space<vmem>>, vector<128x256xbf16>
    %c0_7 = arith.constant 0 : index
    %c0_8 = arith.constant 0 : index
    %4 = vector.load %arg6[%c0_7, %c0_8] : memref<1x128xf32, #tpu.memory_space<vmem>>, vector<1x128xf32>
    %5 = arith.truncf %2 : vector<128x128xf32> to vector<128x128xbf16>
    %cst = arith.constant dense<0.000000e+00> : vector<128x256xf32>
    %6 = tpu.matmul %5, %3, %cst {dimension_numbers = #tpu.dot_dimension_numbers<[1], [0], [0], [1], [0, 0, 1, 1], [], []>} : vector<128x128xbf16>, vector<128x256xbf16>, vector<128x256xf32> -> vector<128x256xf32>
    %7 = vector.extract_strided_slice %6 {offsets = [0, 0], sizes = [128, 128], strides = [1, 1]} : vector<128x256xf32> to vector<128x128xf32>
    %8 = vector.extract_strided_slice %6 {offsets = [0, 128], sizes = [128, 128], strides = [1, 1]} : vector<128x256xf32> to vector<128x128xf32>
    %9 = arith.truncf %8 : vector<128x128xf32> to vector<128x128xbf16>
    %cst_9 = arith.constant dense<0.000000e+00> : vector<128x128xf32>
    %10 = tpu.matmul %0, %9, %cst_9 {dimension_numbers = #tpu.dot_dimension_numbers<[1], [0], [0], [1], [0, 0, 1, 1], [], []>} : vector<128x128xbf16>, vector<128x128xbf16>, vector<128x128xf32> -> vector<128x128xf32>
    %11 = vector.broadcast %1 : vector<128x1xf32> to vector<128x128xf32>
    %12 = arith.mulf %11, %10 : vector<128x128xf32>
    %13 = arith.addf %7, %12 : vector<128x128xf32>
    %14 = vector.broadcast %4 : vector<1x128xf32> to vector<128x128xf32>
    %15 = arith.addf %13, %14 : vector<128x128xf32>
    %cst_10 = arith.constant 0.000000e+00 : f32
    %16 = vector.broadcast %cst_10 : f32 to vector<128x128xf32>
    %17 = arith.maximumf %15, %16 : vector<128x128xf32>
    %c0_11 = arith.constant 0 : index
    %c0_12 = arith.constant 0 : index
    %18 = vector.load %arg5[%c0_11, %c0_12] : memref<128x256xbf16, #tpu.memory_space<vmem>>, vector<128x256xbf16>
    %c0_13 = arith.constant 0 : index
    %c0_14 = arith.constant 0 : index
    %19 = vector.load %arg7[%c0_13, %c0_14] : memref<1x128xf32, #tpu.memory_space<vmem>>, vector<1x128xf32>
    %20 = arith.truncf %17 : vector<128x128xf32> to vector<128x128xbf16>
    %cst_15 = arith.constant dense<0.000000e+00> : vector<128x256xf32>
    %21 = tpu.matmul %20, %18, %cst_15 {dimension_numbers = #tpu.dot_dimension_numbers<[1], [0], [0], [1], [0, 0, 1, 1], [], []>} : vector<128x128xbf16>, vector<128x256xbf16>, vector<128x256xf32> -> vector<128x256xf32>
    %22 = vector.extract_strided_slice %21 {offsets = [0, 0], sizes = [128, 128], strides = [1, 1]} : vector<128x256xf32> to vector<128x128xf32>
    %23 = vector.extract_strided_slice %21 {offsets = [0, 128], sizes = [128, 128], strides = [1, 1]} : vector<128x256xf32> to vector<128x128xf32>
    %24 = arith.truncf %23 : vector<128x128xf32> to vector<128x128xbf16>
    %cst_16 = arith.constant dense<0.000000e+00> : vector<128x128xf32>
    %25 = tpu.matmul %0, %24, %cst_16 {dimension_numbers = #tpu.dot_dimension_numbers<[1], [0], [0], [1], [0, 0, 1, 1], [], []>} : vector<128x128xbf16>, vector<128x128xbf16>, vector<128x128xf32> -> vector<128x128xf32>
    %26 = vector.broadcast %1 : vector<128x1xf32> to vector<128x128xf32>
    %27 = arith.mulf %26, %25 : vector<128x128xf32>
    %28 = arith.addf %22, %27 : vector<128x128xf32>
    %29 = vector.broadcast %19 : vector<1x128xf32> to vector<128x128xf32>
    %30 = arith.addf %28, %29 : vector<128x128xf32>
    %31 = tpu.iota {dimensions = array<i32: 1>} : vector<128x128xi32>
    %c8_i32 = arith.constant 8 : i32
    %32 = vector.broadcast %c8_i32 : i32 to vector<128x128xi32>
    %33 = arith.cmpi slt, %31, %32 : vector<128x128xi32>
    %cst_17 = arith.constant -1.000000e+30 : f32
    %34 = vector.broadcast %cst_17 : f32 to vector<128x128xf32>
    %35 = arith.select %33, %30, %34 : vector<128x128xi1>, vector<128x128xf32>
    %cst_18 = arith.constant dense<0xFF800000> : vector<128xf32>
    %36 = vector.multi_reduction <maximumf>, %35, %cst_18 [1] : vector<128x128xf32> to vector<128xf32>
    %37 = vector.shape_cast %36 : vector<128xf32> to vector<128x1xf32>
    %38 = vector.broadcast %37 : vector<128x1xf32> to vector<128x128xf32>
    %39 = arith.subf %35, %38 : vector<128x128xf32>
    %40 = math.exp %39 : vector<128x128xf32>
    %cst_19 = arith.constant dense<0.000000e+00> : vector<128xf32>
    %41 = vector.multi_reduction <add>, %40, %cst_19 [1] : vector<128x128xf32> to vector<128xf32>
    %42 = vector.shape_cast %41 : vector<128xf32> to vector<128x1xf32>
    %43 = math.log %42 : vector<128x1xf32>
    %44 = vector.broadcast %43 : vector<128x1xf32> to vector<128x128xf32>
    %45 = arith.subf %39, %44 : vector<128x128xf32>
    %c0_20 = arith.constant 0 : index
    %c0_21 = arith.constant 0 : index
    %46 = vector.load %arg8[%c0_20, %c0_21] : memref<128x128xf32, #tpu.memory_space<vmem>>, vector<128x128xf32>
    tpu.vector_store %arg8[%c0_20, %c0_21], %45 {strides = array<i32>} : memref<128x128xf32, #tpu.memory_space<vmem>>, vector<128x128xf32>,
    return
  }
  func.func @transform_0(%arg0: i32) -> (i32, i32) {
    %c0_i32 = arith.constant 0 : i32
    %c0_i32_0 = arith.constant 0 : i32
    %c0_i32_1 = arith.constant 0 : i32
    return %c0_i32, %c0_i32_0 : i32, i32
  }
  func.func @transform_1(%arg0: i32) -> (i32, i32) {
    %c0_i32 = arith.constant 0 : i32
    %c0_i32_0 = arith.constant 0 : i32
    %c0_i32_1 = arith.constant 0 : i32
    return %c0_i32, %c0_i32_0 : i32, i32
  }
  func.func @transform_2(%arg0: i32) -> (i32, i32) {
    %c0_i32 = arith.constant 0 : i32
    %c0_i32_0 = arith.constant 0 : i32
    %c0_i32_1 = arith.constant 0 : i32
    return %c0_i32, %c0_i32_0 : i32, i32
  }
  func.func @transform_3(%arg0: i32) -> (i32, i32) {
    %c0_i32 = arith.constant 0 : i32
    %c0_i32_0 = arith.constant 0 : i32
    %c0_i32_1 = arith.constant 0 : i32
    return %c0_i32, %c0_i32_0 : i32, i32
  }
  func.func @transform_4(%arg0: i32) -> (i32, i32) {
    %c0_i32 = arith.constant 0 : i32
    %c0_i32_0 = arith.constant 0 : i32
    %c0_i32_1 = arith.constant 0 : i32
    return %c0_i32, %c0_i32_0 : i32, i32
  }
  func.func @transform_5(%arg0: i32) -> (i32, i32) {
    %c0_i32 = arith.constant 0 : i32
    %c0_i32_0 = arith.constant 0 : i32
    %c0_i32_1 = arith.constant 0 : i32
    return %c0_i32, %c0_i32_0 : i32, i32
  }
  func.func @transform_6(%arg0: i32) -> (i32, i32) {
    %c0_i32 = arith.constant 0 : i32
    %c0_i32_0 = arith.constant 0 : i32
    %c0_i32_1 = arith.constant 0 : i32
    return %c0_i32, %c0_i32_0 : i32, i32
  }
  func.func @transform_7(%arg0: i32) -> (i32, i32) {
    %c0_i32 = arith.constant 0 : i32
    %c0_i32_0 = arith.constant 0 : i32
    %c0_i32_1 = arith.constant 0 : i32
    return %c0_i32, %c0_i32_0 : i32, i32
  }
}

</mosaic_0001>

<llo_original>
// kernel: tpu_custom_call.1
$region0: #{tpu_custom_call.1}
  #allocation0 [shape = 'u32[]', space=smem, size = 0x4, offset = 0x4, fixed_abs, tag = 'smem constant byte address 0x4 - core index']
  #allocation1 [shape = 'u32[72,128]{1,0:T(1,128)}', space=vmem, size = 0x9000, scoped, tag = 'internal scratch']
  %s0 = inlined_call_operand.vmem [shape: f32[128,128], index: 0, kind: input, shape index: {}]
  %s1 = inlined_call_operand.hbm [shape: bf16[128,128], index: 1, kind: input, shape index: {}]
  %s2 = inlined_call_operand.vmem [shape: f32[128,1], index: 2, kind: input, shape index: {}]
  %s3 = inlined_call_operand.hbm [shape: bf16[128,256], index: 3, kind: input, shape index: {}]
  %s4 = inlined_call_operand.hbm [shape: bf16[128,256], index: 4, kind: input, shape index: {}]
  %s5 = inlined_call_operand.vmem [shape: f32[1,128], index: 5, kind: input, shape index: {}]
  %s6 = inlined_call_operand.vmem [shape: f32[1,128], index: 6, kind: input, shape index: {}]
  %s7 = inlined_call_operand.hbm [shape: f32[128,128], index: 7, kind: output, shape index: {}]
  %s8 = sld [smem:[#allocation0]]
  $region50: #{tpu_custom_call.1} parent=0
    _
  %s10 = ssub.s32 1, %s8
  %s11 = scalar_select 0, %s10, %s8
  $region1: #{tpu_custom_call.1} parent=0
    #allocation2 [shape = 'u8[32768]{0}', space=vmem, size = 0x8000, scoped, tag = 'input window, operand 1, single buffered']
    #allocation3 [shape = 's32[1]{0}', space=sflag, size = 0x4, scoped, tag = 'scoped memory for tpu_custom_call.1']
    #allocation4 [shape = 's32[1]{0}', space=sflag, size = 0x4, scoped, tag = 'scoped memory for tpu_custom_call.1']
    #allocation5 [shape = 'u8[65536]{0}', space=vmem, size = 0x10000, scoped, tag = 'input window, operand 3, single buffered']
    #allocation6 [shape = 's32[1]{0}', space=sflag, size = 0x4, scoped, tag = 'scoped memory for tpu_custom_call.1']
    #allocation7 [shape = 'u8[65536]{0}', space=vmem, size = 0x10000, scoped, tag = 'input window, operand 4, single buffered']
    #allocation8 [shape = 'u8[65536]{0}', space=vmem, size = 0x10000, scoped, tag = 'output window, operand 0, single buffered']
    %12 = vsyncpa [#allocation3], 0
    %13 = vsyncpa [#allocation6], 0
    %14 = vsyncpa [#allocation4], 0
    // Predicated region
    $region2: #{tpu_custom_call.1} parent=1 // pred_check
      _
    $region3: #{tpu_custom_call.1} parent=1 // pred_check_branch
      %16 = sbr.rel (0) target = $region5
    $region4: #{tpu_custom_call.1} parent=1 // pred_region
      _
    $region5: #{tpu_custom_call.1} parent=1 // pred_fallthru
      _
    // Predicated region
    $region6: #{tpu_custom_call.1} parent=1 // pred_check
      _
    $region7: #{tpu_custom_call.1} parent=1 // pred_check_branch
      %18 = sbr.rel (0) target = $region9
    $region8: #{tpu_custom_call.1} parent=1 // pred_region
      %20 = vsyncadd [#allocation3], 0
      %s21 = sshll.u32 %s1, 4
      %s22 = int_to_ptr.hbm [resolvable:$true] %s21
      %s23 = sshll.u32 [#allocation2], 4
      %s24 = int_to_ptr.vmem [resolvable:$true] %s23
      %29 = dma.hbm_to_vmem [thread:$0]  %s22, 1024, %s24, [#allocation3], 64, 64, 4
    $region9: #{tpu_custom_call.1} parent=1 // pred_fallthru
      _
    // Predicated region
    $region10: #{tpu_custom_call.1} parent=1 // pred_check
      _
    $region11: #{tpu_custom_call.1} parent=1 // pred_check_branch
      %31 = sbr.rel (0) target = $region13
    $region12: #{tpu_custom_call.1} parent=1 // pred_region
      _
    $region13: #{tpu_custom_call.1} parent=1 // pred_fallthru
      _
    // Predicated region
    $region14: #{tpu_custom_call.1} parent=1 // pred_check
      _
    $region15: #{tpu_custom_call.1} parent=1 // pred_check_branch
      %33 = sbr.rel (0) target = $region17
    $region16: #{tpu_custom_call.1} parent=1 // pred_region
      %35 = vsyncadd [#allocation6], 0
      %s36 = sshll.u32 %s3, 4
      %s37 = int_to_ptr.hbm [resolvable:$true] %s36
      %s38 = sshll.u32 [#allocation5], 4
      %s39 = int_to_ptr.vmem [resolvable:$true] %s38
      %44 = dma.hbm_to_vmem [thread:$0]  %s37, 2048, %s39, [#allocation6], 128, 128, 8
    $region17: #{tpu_custom_call.1} parent=1 // pred_fallthru
      _
    // Predicated region
    $region18: #{tpu_custom_call.1} parent=1 // pred_check
      _
    $region19: #{tpu_custom_call.1} parent=1 // pred_check_branch
      %46 = sbr.rel (0) target = $region21
    $region20: #{tpu_custom_call.1} parent=1 // pred_region
      %48 = vsyncadd [#allocation6], 0
      %s49 = sshll.u32 %s4, 4
      %s50 = int_to_ptr.hbm [resolvable:$true] %s49
      %s51 = sshll.u32 [#allocation7], 4
      %s52 = int_to_ptr.vmem [resolvable:$true] %s51
      %57 = dma.hbm_to_vmem [thread:$0]  %s50, 2048, %s52, [#allocation6], 128, 128, 8
    $region21: #{tpu_custom_call.1} parent=1 // pred_fallthru
      _
    // Predicated region
    $region22: #{tpu_custom_call.1} parent=1 // pred_check
      _
    $region23: #{tpu_custom_call.1} parent=1 // pred_check_branch
      %59 = sbr.rel (0) target = $region25
    $region24: #{tpu_custom_call.1} parent=1 // pred_region
      _
    $region25: #{tpu_custom_call.1} parent=1 // pred_fallthru
      _
    // Predicated region
    $region26: #{tpu_custom_call.1} parent=1 // pred_check
      _
    $region27: #{tpu_custom_call.1} parent=1 // pred_check_branch
      %61 = sbr.rel (0) target = $region29
    $region28: #{tpu_custom_call.1} parent=1 // pred_region
      _
    $region29: #{tpu_custom_call.1} parent=1 // pred_fallthru
      _
    // Predicated region
    $region30: #{tpu_custom_call.1} parent=1 // pred_check
      _
    $region31: #{tpu_custom_call.1} parent=1 // pred_check_branch
      %63 = sbr.rel (0) target = $region33
    $region32: #{tpu_custom_call.1} parent=1 // pred_region
      %65 = dma.done [#allocation3], 1024
    $region33: #{tpu_custom_call.1} parent=1 // pred_fallthru
      _
    // Predicated region
    $region34: #{tpu_custom_call.1} parent=1 // pred_check
      _
    $region35: #{tpu_custom_call.1} parent=1 // pred_check_branch
      %67 = sbr.rel (0) target = $region37
    $region36: #{tpu_custom_call.1} parent=1 // pred_region
      %69 = dma.done [#allocation6], 2048
    $region37: #{tpu_custom_call.1} parent=1 // pred_fallthru
      _
    // Predicated region
    $region38: #{tpu_custom_call.1} parent=1 // pred_check
      _
    $region39: #{tpu_custom_call.1} parent=1 // pred_check_branch
      %71 = sbr.rel (0) target = $region41
    $region40: #{tpu_custom_call.1} parent=1 // pred_region
      %73 = dma.done [#allocation6], 2048
    $region41: #{tpu_custom_call.1} parent=1 // pred_fallthru
      _
    %v74 = vld [vmem:[#allocation2] sm:$0xf]
    %v75 = vld [vmem:[#allocation2 + $0x4] sm:$0xf]
    %v76 = vld [vmem:[#allocation2 + $0x8] sm:$0xf]
    %v77 = vld [vmem:[#allocation2 + $0xc] sm:$0xf]
    %v78 = vld [vmem:[#allocation2 + $0x10] sm:$0xf]
    %v79 = vld [vmem:[#allocation2 + $0x14] sm:$0xf]
    %v80 = vld [vmem:[#allocation2 + $0x18] sm:$0xf]
    %v81 = vld [vmem:[#allocation2 + $0x1c] sm:$0xf]
    %v82 = vld [vmem:[#allocation2 + $0x20] sm:$0xf]
    %v83 = vld [vmem:[#allocation2 + $0x24] sm:$0xf]
    %v84 = vld [vmem:[#allocation2 + $0x28] sm:$0xf]
    %v85 = vld [vmem:[#allocation2 + $0x2c] sm:$0xf]
    %v86 = vld [vmem:[#allocation2 + $0x30] sm:$0xf]
    %v87 = vld [vmem:[#allocation2 + $0x34] sm:$0xf]
    %v88 = vld [vmem:[#allocation2 + $0x38] sm:$0xf]
    %v89 = vld [vmem:[#allocation2 + $0x3c] sm:$0xf]
    %v90 = vld [vmem:[%s2] sm:$0xff]
    %v91 = vld [vmem:[%s2 + $0x8] sm:$0xff]
    %v92 = vld [vmem:[%s2 + $0x10] sm:$0xff]
    %v93 = vld [vmem:[%s2 + $0x18] sm:$0xff]
    %v94 = vld [vmem:[%s2 + $0x20] sm:$0xff]
    %v95 = vld [vmem:[%s2 + $0x28] sm:$0xff]
    %v96 = vld [vmem:[%s2 + $0x30] sm:$0xff]
    %v97 = vld [vmem:[%s2 + $0x38] sm:$0xff]
    %v98 = vld [vmem:[%s2 + $0x40] sm:$0xff]
    %v99 = vld [vmem:[%s2 + $0x48] sm:$0xff]
    %v100 = vld [vmem:[%s2 + $0x50] sm:$0xff]
    %v101 = vld [vmem:[%s2 + $0x58] sm:$0xff]
    %v102 = vld [vmem:[%s2 + $0x60] sm:$0xff]
    %v103 = vld [vmem:[%s2 + $0x68] sm:$0xff]
    %v104 = vld [vmem:[%s2 + $0x70] sm:$0xff]
    %v105 = vld [vmem:[%s2 + $0x78] sm:$0xff]
    %v106 = vld [vmem:[%s0] sm:$0xff]
    %v107 = vld [vmem:[%s0 + $0x8] sm:$0xff]
    %v108 = vld [vmem:[%s0 + $0x10] sm:$0xff]
    %v109 = vld [vmem:[%s0 + $0x18] sm:$0xff]
    %v110 = vld [vmem:[%s0 + $0x20] sm:$0xff]
    %v111 = vld [vmem:[%s0 + $0x28] sm:$0xff]
    %v112 = vld [vmem:[%s0 + $0x30] sm:$0xff]
    %v113 = vld [vmem:[%s0 + $0x38] sm:$0xff]
    %v114 = vld [vmem:[%s0 + $0x40] sm:$0xff]
    %v115 = vld [vmem:[%s0 + $0x48] sm:$0xff]
    %v116 = vld [vmem:[%s0 + $0x50] sm:$0xff]
    %v117 = vld [vmem:[%s0 + $0x58] sm:$0xff]
    %v118 = vld [vmem:[%s0 + $0x60] sm:$0xff]
    %v119 = vld [vmem:[%s0 + $0x68] sm:$0xff]
    %v120 = vld [vmem:[%s0 + $0x70] sm:$0xff]
    %v121 = vld [vmem:[%s0 + $0x78] sm:$0xff]
    %v122 = vld [vmem:[#allocation5] sm:$0xff]
    %v123 = vld [vmem:[#allocation5 + $0x8] sm:$0xff]
    %v124 = vld [vmem:[#allocation5 + $0x10] sm:$0xff]
    %v125 = vld [vmem:[#allocation5 + $0x18] sm:$0xff]
    %v126 = vld [vmem:[#allocation5 + $0x20] sm:$0xff]
    %v127 = vld [vmem:[#allocation5 + $0x28] sm:$0xff]
    %v128 = vld [vmem:[#allocation5 + $0x30] sm:$0xff]
    %v129 = vld [vmem:[#allocation5 + $0x38] sm:$0xff]
    %v130 = vld [vmem:[#allocation5 + $0x40] sm:$0xff]
    %v131 = vld [vmem:[#allocation5 + $0x48] sm:$0xff]
    %v132 = vld [vmem:[#allocation5 + $0x50] sm:$0xff]
    %v133 = vld [vmem:[#allocation5 + $0x58] sm:$0xff]
    %v134 = vld [vmem:[#allocation5 + $0x60] sm:$0xff]
    %v135 = vld [vmem:[#allocation5 + $0x68] sm:$0xff]
    %v136 = vld [vmem:[#allocation5 + $0x70] sm:$0xff]
    %v137 = vld [vmem:[#allocation5 + $0x78] sm:$0xff]
    %v138 = vld [vmem:[%s5] sm:$0x1]
    %v139 = vpack.c.bf16 %v107, %v106
    %v140 = vpack.c.bf16 %v109, %v108
    %v141 = vpack.c.bf16 %v111, %v110
    %v142 = vpack.c.bf16 %v113, %v112
    %v143 = vpack.c.bf16 %v115, %v114
    %v144 = vpack.c.bf16 %v117, %v116
    %v145 = vpack.c.bf16 %v119, %v118
    %v146 = vpack.c.bf16 %v121, %v120
    %v163 = vunpack.c.l.b16 %v122
    %v164 = vunpack.c.h.b16 %v122
    %v165 = vunpack.c.l.b16 %v123
    %v166 = vunpack.c.h.b16 %v123
    %v167 = vunpack.c.l.b16 %v124
    %v168 = vunpack.c.h.b16 %v124
    %v169 = vunpack.c.l.b16 %v125
    %v170 = vunpack.c.h.b16 %v125
    %v171 = vunpack.c.l.b16 %v126
    %v172 = vunpack.c.h.b16 %v126
    %v173 = vunpack.c.l.b16 %v127
    %v174 = vunpack.c.h.b16 %v127
    %v175 = vunpack.c.l.b16 %v128
    %v176 = vunpack.c.h.b16 %v128
    %v177 = vunpack.c.l.b16 %v129
    %v178 = vunpack.c.h.b16 %v129
    %v179 = vunpack.c.l.b16 %v130
    %v180 = vunpack.c.h.b16 %v130
    %v181 = vunpack.c.l.b16 %v131
    %v182 = vunpack.c.h.b16 %v131
    %v183 = vunpack.c.l.b16 %v132
    %v184 = vunpack.c.h.b16 %v132
    %v185 = vunpack.c.l.b16 %v133
    %v186 = vunpack.c.h.b16 %v133
    %v187 = vunpack.c.l.b16 %v134
    %v188 = vunpack.c.h.b16 %v134
    %v189 = vunpack.c.l.b16 %v135
    %v190 = vunpack.c.h.b16 %v135
    %v191 = vunpack.c.l.b16 %v136
    %v192 = vunpack.c.h.b16 %v136
    %v193 = vunpack.c.l.b16 %v137
    %v194 = vunpack.c.h.b16 %v137
    %v195 = vpack.c.b16 %v165, %v163
    %v196 = vpack.c.b16 %v166, %v164
    %v197 = vpack.c.b16 %v169, %v167
    %v198 = vpack.c.b16 %v170, %v168
    %v199 = vpack.c.b16 %v173, %v171
    %v200 = vpack.c.b16 %v174, %v172
    %v201 = vpack.c.b16 %v177, %v175
    %v202 = vpack.c.b16 %v178, %v176
    %v203 = vpack.c.b16 %v181, %v179
    %v204 = vpack.c.b16 %v182, %v180
    %v205 = vpack.c.b16 %v185, %v183
    %v206 = vpack.c.b16 %v186, %v184
    %v207 = vpack.c.b16 %v189, %v187
    %v208 = vpack.c.b16 %v190, %v188
    %v209 = vpack.c.b16 %v193, %v191
    %v210 = vpack.c.b16 %v194, %v192
    %227 = vmatpush.bf16.msra.mxu0 %v209
    %228 = vmatpush.bf16.msra.mxu0 %v207
    %229 = vmatpush.bf16.msra.mxu0 %v205
    %230 = vmatpush.bf16.msra.mxu0 %v203
    %231 = vmatpush.bf16.msra.mxu0 %v201
    %232 = vmatpush.bf16.msra.mxu0 %v199
    %233 = vmatpush.bf16.msra.mxu0 %v197
    %234 = vmatpush.bf16.msra.mxu0 %v195
    %235 = vmatmul.bf16.gmra.mxu0 %v139
    %v236 = vpop.f32.mrf.mxu0
    %v237 = vadd.f32 0.0, %v236
    %v238 = vpop.f32.mrf.mxu0
    %v239 = vadd.f32 0.0, %v238
    %240 = vmatmul.bf16.gmra.mxu0 %v140
    %v241 = vpop.f32.mrf.mxu0
    %v242 = vadd.f32 0.0, %v241
    %v243 = vpop.f32.mrf.mxu0
    %v244 = vadd.f32 0.0, %v243
    %245 = vmatmul.bf16.gmra.mxu0 %v141
    %v246 = vpop.f32.mrf.mxu0
    %v247 = vadd.f32 0.0, %v246
    %v248 = vpop.f32.mrf.mxu0
    %v249 = vadd.f32 0.0, %v248
    %250 = vmatmul.bf16.gmra.mxu0 %v142
    %v251 = vpop.f32.mrf.mxu0
    %v252 = vadd.f32 0.0, %v251
    %v253 = vpop.f32.mrf.mxu0
    %v254 = vadd.f32 0.0, %v253
    %255 = vmatmul.bf16.gmra.mxu0 %v143
    %v256 = vpop.f32.mrf.mxu0
    %v257 = vadd.f32 0.0, %v256
    %v258 = vpop.f32.mrf.mxu0
    %v259 = vadd.f32 0.0, %v258
    %260 = vmatmul.bf16.gmra.mxu0 %v144
    %v261 = vpop.f32.mrf.mxu0
    %v262 = vadd.f32 0.0, %v261
    %v263 = vpop.f32.mrf.mxu0
    %v264 = vadd.f32 0.0, %v263
    %265 = vmatmul.bf16.gmra.mxu0 %v145
    %v266 = vpop.f32.mrf.mxu0
    %v267 = vadd.f32 0.0, %v266
    %v268 = vpop.f32.mrf.mxu0
    %v269 = vadd.f32 0.0, %v268
    %270 = vmatmul.bf16.gmra.mxu0 %v146
    %v271 = vpop.f32.mrf.mxu0
    %v272 = vadd.f32 0.0, %v271
    %v273 = vpop.f32.mrf.mxu0
    %v274 = vadd.f32 0.0, %v273
    %275 = vdwg.mxu0
    %276 = vmatpush.bf16.msra.mxu0 %v210
    %277 = vmatpush.bf16.msra.mxu0 %v208
    %278 = vmatpush.bf16.msra.mxu0 %v206
    %279 = vmatpush.bf16.msra.mxu0 %v204
    %280 = vmatpush.bf16.msra.mxu0 %v202
    %281 = vmatpush.bf16.msra.mxu0 %v200
    %282 = vmatpush.bf16.msra.mxu0 %v198
    %283 = vmatpush.bf16.msra.mxu0 %v196
    %284 = vmatmul.bf16.gmra.mxu0 %v139
    %v285 = vpop.f32.mrf.mxu0
    %v286 = vadd.f32 0.0, %v285
    %v287 = vpop.f32.mrf.mxu0
    %v288 = vadd.f32 0.0, %v287
    %289 = vmatmul.bf16.gmra.mxu0 %v140
    %v290 = vpop.f32.mrf.mxu0
    %v291 = vadd.f32 0.0, %v290
    %v292 = vpop.f32.mrf.mxu0
    %v293 = vadd.f32 0.0, %v292
    %294 = vmatmul.bf16.gmra.mxu0 %v141
    %v295 = vpop.f32.mrf.mxu0
    %v296 = vadd.f32 0.0, %v295
    %v297 = vpop.f32.mrf.mxu0
    %v298 = vadd.f32 0.0, %v297
    %299 = vmatmul.bf16.gmra.mxu0 %v142
    %v300 = vpop.f32.mrf.mxu0
    %v301 = vadd.f32 0.0, %v300
    %v302 = vpop.f32.mrf.mxu0
    %v303 = vadd.f32 0.0, %v302
    %304 = vmatmul.bf16.gmra.mxu0 %v143
    %v305 = vpop.f32.mrf.mxu0
    %v306 = vadd.f32 0.0, %v305
    %v307 = vpop.f32.mrf.mxu0
    %v308 = vadd.f32 0.0, %v307
    %309 = vmatmul.bf16.gmra.mxu0 %v144
    %v310 = vpop.f32.mrf.mxu0
    %v311 = vadd.f32 0.0, %v310
    %v312 = vpop.f32.mrf.mxu0
    %v313 = vadd.f32 0.0, %v312
    %314 = vmatmul.bf16.gmra.mxu0 %v145
    %v315 = vpop.f32.mrf.mxu0
    %v316 = vadd.f32 0.0, %v315
    %v317 = vpop.f32.mrf.mxu0
    %v318 = vadd.f32 0.0, %v317
    %319 = vmatmul.bf16.gmra.mxu0 %v146
    %v320 = vpop.f32.mrf.mxu0
    %v321 = vadd.f32 0.0, %v320
    %v322 = vpop.f32.mrf.mxu0
    %v323 = vadd.f32 0.0, %v322
    %324 = vdwg.mxu0
    %v325 = vpack.c.bf16 %v288, %v286
    %v326 = vpack.c.bf16 %v293, %v291
    %v327 = vpack.c.bf16 %v298, %v296
    %v328 = vpack.c.bf16 %v303, %v301
    %v329 = vpack.c.bf16 %v308, %v306
    %v330 = vpack.c.bf16 %v313, %v311
    %v331 = vpack.c.bf16 %v318, %v316
    %v332 = vpack.c.bf16 %v323, %v321
    %v349 = vunpack.c.l.b16 %v74
    %v350 = vunpack.c.l.b16 %v75
    %v351 = vunpack.c.l.b16 %v76
    %v352 = vunpack.c.l.b16 %v77
    %v353 = vunpack.c.l.b16 %v78
    %v354 = vunpack.c.l.b16 %v79
    %v355 = vunpack.c.l.b16 %v80
    %v356 = vunpack.c.l.b16 %v81
    %v357 = vunpack.c.l.b16 %v82
    %v358 = vunpack.c.l.b16 %v83
    %v359 = vunpack.c.l.b16 %v84
    %v360 = vunpack.c.l.b16 %v85
    %v361 = vunpack.c.l.b16 %v86
    %v362 = vunpack.c.l.b16 %v87
    %v363 = vunpack.c.l.b16 %v88
    %v364 = vunpack.c.l.b16 %v89
    %v365 = vpack.c.b16 %v350, %v349
    %v366 = vpack.c.b16 %v352, %v351
    %v367 = vpack.c.b16 %v354, %v353
    %v368 = vpack.c.b16 %v356, %v355
    %v369 = vpack.c.b16 %v358, %v357
    %v370 = vpack.c.b16 %v360, %v359
    %v371 = vpack.c.b16 %v362, %v361
    %v372 = vpack.c.b16 %v364, %v363
    %381 = vmatpush.bf16.msra.mxu0 %v332
    %382 = vmatpush.bf16.msra.mxu0 %v331
    %383 = vmatpush.bf16.msra.mxu0 %v330
    %384 = vmatpush.bf16.msra.mxu0 %v329
    %385 = vmatpush.bf16.msra.mxu0 %v328
    %386 = vmatpush.bf16.msra.mxu0 %v327
    %387 = vmatpush.bf16.msra.mxu0 %v326
    %388 = vmatpush.bf16.msra.mxu0 %v325
    %389 = vmatmul.bf16.gmra.mxu0 %v365
    %v390 = vpop.f32.mrf.mxu0
    %v391 = vadd.f32 0.0, %v390
    %v392 = vpop.f32.mrf.mxu0
    %v393 = vadd.f32 0.0, %v392
    %394 = vmatmul.bf16.gmra.mxu0 %v366
    %v395 = vpop.f32.mrf.mxu0
    %v396 = vadd.f32 0.0, %v395
    %v397 = vpop.f32.mrf.mxu0
    %v398 = vadd.f32 0.0, %v397
    %399 = vmatmul.bf16.gmra.mxu0 %v367
    %v400 = vpop.f32.mrf.mxu0
    %v401 = vadd.f32 0.0, %v400
    %v402 = vpop.f32.mrf.mxu0
    %v403 = vadd.f32 0.0, %v402
    %404 = vmatmul.bf16.gmra.mxu0 %v368
    %v405 = vpop.f32.mrf.mxu0
    %v406 = vadd.f32 0.0, %v405
    %v407 = vpop.f32.mrf.mxu0
    %v408 = vadd.f32 0.0, %v407
    %409 = vmatmul.bf16.gmra.mxu0 %v369
    %v410 = vpop.f32.mrf.mxu0
    %v411 = vadd.f32 0.0, %v410
    %v412 = vpop.f32.mrf.mxu0
    %v413 = vadd.f32 0.0, %v412
    %414 = vmatmul.bf16.gmra.mxu0 %v370
    %v415 = vpop.f32.mrf.mxu0
    %v416 = vadd.f32 0.0, %v415
    %v417 = vpop.f32.mrf.mxu0
    %v418 = vadd.f32 0.0, %v417
    %419 = vmatmul.bf16.gmra.mxu0 %v371
    %v420 = vpop.f32.mrf.mxu0
    %v421 = vadd.f32 0.0, %v420
    %v422 = vpop.f32.mrf.mxu0
    %v423 = vadd.f32 0.0, %v422
    %424 = vmatmul.bf16.gmra.mxu0 %v372
    %v425 = vpop.f32.mrf.mxu0
    %v426 = vadd.f32 0.0, %v425
    %v427 = vpop.f32.mrf.mxu0
    %v428 = vadd.f32 0.0, %v427
    %429 = vdwg.mxu0
    %431 = vset.pattern.permute.xlu0 0
    %432 = vperm.xlu0 %431, %v90
    %v433 = vpop.permute.xlu0 %432
    %436 = vset.pattern.permute.xlu0 0
    %437 = vperm.xlu0 %436, %v91
    %v438 = vpop.permute.xlu0 %437
    %441 = vset.pattern.permute.xlu0 0
    %442 = vperm.xlu0 %441, %v92
    %v443 = vpop.permute.xlu0 %442
    %446 = vset.pattern.permute.xlu0 0
    %447 = vperm.xlu0 %446, %v93
    %v448 = vpop.permute.xlu0 %447
    %451 = vset.pattern.permute.xlu0 0
    %452 = vperm.xlu0 %451, %v94
    %v453 = vpop.permute.xlu0 %452
    %456 = vset.pattern.permute.xlu0 0
    %457 = vperm.xlu0 %456, %v95
    %v458 = vpop.permute.xlu0 %457
    %461 = vset.pattern.permute.xlu0 0
    %462 = vperm.xlu0 %461, %v96
    %v463 = vpop.permute.xlu0 %462
    %466 = vset.pattern.permute.xlu0 0
    %467 = vperm.xlu0 %466, %v97
    %v468 = vpop.permute.xlu0 %467
    %471 = vset.pattern.permute.xlu0 0
    %472 = vperm.xlu0 %471, %v98
    %v473 = vpop.permute.xlu0 %472
    %476 = vset.pattern.permute.xlu0 0
    %477 = vperm.xlu0 %476, %v99
    %v478 = vpop.permute.xlu0 %477
    %481 = vset.pattern.permute.xlu0 0
    %482 = vperm.xlu0 %481, %v100
    %v483 = vpop.permute.xlu0 %482
    %486 = vset.pattern.permute.xlu0 0
    %487 = vperm.xlu0 %486, %v101
    %v488 = vpop.permute.xlu0 %487
    %491 = vset.pattern.permute.xlu0 0
    %492 = vperm.xlu0 %491, %v102
    %v493 = vpop.permute.xlu0 %492
    %496 = vset.pattern.permute.xlu0 0
    %497 = vperm.xlu0 %496, %v103
    %v498 = vpop.permute.xlu0 %497
    %501 = vset.pattern.permute.xlu0 0
    %502 = vperm.xlu0 %501, %v104
    %v503 = vpop.permute.xlu0 %502
    %506 = vset.pattern.permute.xlu0 0
    %507 = vperm.xlu0 %506, %v105
    %v508 = vpop.permute.xlu0 %507
    %v510 = vmul.f32 %v433, %v391
    %v511 = vmul.f32 %v438, %v393
    %v512 = vmul.f32 %v443, %v396
    %v513 = vmul.f32 %v448, %v398
    %v514 = vmul.f32 %v453, %v401
    %v515 = vmul.f32 %v458, %v403
    %v516 = vmul.f32 %v463, %v406
    %v517 = vmul.f32 %v468, %v408
    %v518 = vmul.f32 %v473, %v411
    %v519 = vmul.f32 %v478, %v413
    %v520 = vmul.f32 %v483, %v416
    %v521 = vmul.f32 %v488, %v418
    %v522 = vmul.f32 %v493, %v421
    %v523 = vmul.f32 %v498, %v423
    %v524 = vmul.f32 %v503, %v426
    %v525 = vmul.f32 %v508, %v428
    %v526 = vadd.f32 %v237, %v510
    %v527 = vadd.f32 %v239, %v511
    %v528 = vadd.f32 %v242, %v512
    %v529 = vadd.f32 %v244, %v513
    %v530 = vadd.f32 %v247, %v514
    %v531 = vadd.f32 %v249, %v515
    %v532 = vadd.f32 %v252, %v516
    %v533 = vadd.f32 %v254, %v517
    %v534 = vadd.f32 %v257, %v518
    %v535 = vadd.f32 %v259, %v519
    %v536 = vadd.f32 %v262, %v520
    %v537 = vadd.f32 %v264, %v521
    %v538 = vadd.f32 %v267, %v522
    %v539 = vadd.f32 %v269, %v523
    %v540 = vadd.f32 %v272, %v524
    %v541 = vadd.f32 %v274, %v525
    %v543 = vperm.slane %v138, 0
    %v545 = vadd.f32 %v526, %v543
    %v546 = vadd.f32 %v527, %v543
    %v547 = vadd.f32 %v528, %v543
    %v548 = vadd.f32 %v529, %v543
    %v549 = vadd.f32 %v530, %v543
    %v550 = vadd.f32 %v531, %v543
    %v551 = vadd.f32 %v532, %v543
    %v552 = vadd.f32 %v533, %v543
    %v553 = vadd.f32 %v534, %v543
    %v554 = vadd.f32 %v535, %v543
    %v555 = vadd.f32 %v536, %v543
    %v556 = vadd.f32 %v537, %v543
    %v557 = vadd.f32 %v538, %v543
    %v558 = vadd.f32 %v539, %v543
    %v559 = vadd.f32 %v540, %v543
    %v560 = vadd.f32 %v541, %v543
    %v561 = vmax.f32 %v545, 0.0
    %v562 = vmax.f32 %v546, 0.0
    %v563 = vmax.f32 %v547, 0.0
    %v564 = vmax.f32 %v548, 0.0
    %v565 = vmax.f32 %v549, 0.0
    %v566 = vmax.f32 %v550, 0.0
    %v567 = vmax.f32 %v551, 0.0
    %v568 = vmax.f32 %v552, 0.0
    %v569 = vmax.f32 %v553, 0.0
    %v570 = vmax.f32 %v554, 0.0
    %v571 = vmax.f32 %v555, 0.0
    %v572 = vmax.f32 %v556, 0.0
    %v573 = vmax.f32 %v557, 0.0
    %v574 = vmax.f32 %v558, 0.0
    %v575 = vmax.f32 %v559, 0.0
    %v576 = vmax.f32 %v560, 0.0
    %v577 = vld [vmem:[#allocation7] sm:$0xff]
    %v578 = vld [vmem:[#allocation7 + $0x8] sm:$0xff]
    %v579 = vld [vmem:[#allocation7 + $0x10] sm:$0xff]
    %v580 = vld [vmem:[#allocation7 + $0x18] sm:$0xff]
    %v581 = vld [vmem:[#allocation7 + $0x20] sm:$0xff]
    %v582 = vld [vmem:[#allocation7 + $0x28] sm:$0xff]
    %v583 = vld [vmem:[#allocation7 + $0x30] sm:$0xff]
    %v584 = vld [vmem:[#allocation7 + $0x38] sm:$0xff]
    %v585 = vld [vmem:[#allocation7 + $0x40] sm:$0xff]
    %v586 = vld [vmem:[#allocation7 + $0x48] sm:$0xff]
    %v587 = vld [vmem:[#allocation7 + $0x50] sm:$0xff]
    %v588 = vld [vmem:[#allocation7 + $0x58] sm:$0xff]
    %v589 = vld [vmem:[#allocation7 + $0x60] sm:$0xff]
    %v590 = vld [vmem:[#allocation7 + $0x68] sm:$0xff]
    %v591 = vld [vmem:[#allocation7 + $0x70] sm:$0xff]
    %v592 = vld [vmem:[#allocation7 + $0x78] sm:$0xff]
    %v593 = vld [vmem:[%s6] sm:$0x1]
    %v594 = vpack.c.bf16 %v562, %v561
    %v595 = vpack.c.bf16 %v564, %v563
    %v596 = vpack.c.bf16 %v566, %v565
    %v597 = vpack.c.bf16 %v568, %v567
    %v598 = vpack.c.bf16 %v570, %v569
    %v599 = vpack.c.bf16 %v572, %v571
    %v600 = vpack.c.bf16 %v574, %v573
    %v601 = vpack.c.bf16 %v576, %v575
    %v618 = vunpack.c.l.b16 %v577
    %v619 = vunpack.c.h.b16 %v577
    %v620 = vunpack.c.l.b16 %v578
    %v621 = vunpack.c.h.b16 %v578
    %v622 = vunpack.c.l.b16 %v579
    %v623 = vunpack.c.h.b16 %v579
    %v624 = vunpack.c.l.b16 %v580
    %v625 = vunpack.c.h.b16 %v580
    %v626 = vunpack.c.l.b16 %v581
    %v627 = vunpack.c.h.b16 %v581
    %v628 = vunpack.c.l.b16 %v582
    %v629 = vunpack.c.h.b16 %v582
    %v630 = vunpack.c.l.b16 %v583
    %v631 = vunpack.c.h.b16 %v583
    %v632 = vunpack.c.l.b16 %v584
    %v633 = vunpack.c.h.b16 %v584
    %v634 = vunpack.c.l.b16 %v585
    %v635 = vunpack.c.h.b16 %v585
    %v636 = vunpack.c.l.b16 %v586
    %v637 = vunpack.c.h.b16 %v586
    %v638 = vunpack.c.l.b16 %v587
    %v639 = vunpack.c.h.b16 %v587
    %v640 = vunpack.c.l.b16 %v588
    %v641 = vunpack.c.h.b16 %v588
    %v642 = vunpack.c.l.b16 %v589
    %v643 = vunpack.c.h.b16 %v589
    %v644 = vunpack.c.l.b16 %v590
    %v645 = vunpack.c.h.b16 %v590
    %v646 = vunpack.c.l.b16 %v591
    %v647 = vunpack.c.h.b16 %v591
    %v648 = vunpack.c.l.b16 %v592
    %v649 = vunpack.c.h.b16 %v592
    %v650 = vpack.c.b16 %v620, %v618
    %v651 = vpack.c.b16 %v621, %v619
    %v652 = vpack.c.b16 %v624, %v622
    %v653 = vpack.c.b16 %v625, %v623
    %v654 = vpack.c.b16 %v628, %v626
    %v655 = vpack.c.b16 %v629, %v627
    %v656 = vpack.c.b16 %v632, %v630
    %v657 = vpack.c.b16 %v633, %v631
    %v658 = vpack.c.b16 %v636, %v634
    %v659 = vpack.c.b16 %v637, %v635
    %v660 = vpack.c.b16 %v640, %v638
    %v661 = vpack.c.b16 %v641, %v639
    %v662 = vpack.c.b16 %v644, %v642
    %v663 = vpack.c.b16 %v645, %v643
    %v664 = vpack.c.b16 %v648, %v646
    %v665 = vpack.c.b16 %v649, %v647
    %682 = vmatpush.bf16.msra.mxu0 %v664
    %683 = vmatpush.bf16.msra.mxu0 %v662
    %684 = vmatpush.bf16.msra.mxu0 %v660
    %685 = vmatpush.bf16.msra.mxu0 %v658
    %686 = vmatpush.bf16.msra.mxu0 %v656
    %687 = vmatpush.bf16.msra.mxu0 %v654
    %688 = vmatpush.bf16.msra.mxu0 %v652
    %689 = vmatpush.bf16.msra.mxu0 %v650
    %690 = vmatmul.bf16.gmra.mxu0 %v594
    %v691 = vpop.f32.mrf.mxu0
    %v692 = vadd.f32 0.0, %v691
    %v693 = vpop.f32.mrf.mxu0
    %v694 = vadd.f32 0.0, %v693
    %695 = vmatmul.bf16.gmra.mxu0 %v595
    %v696 = vpop.f32.mrf.mxu0
    %v697 = vadd.f32 0.0, %v696
    %v698 = vpop.f32.mrf.mxu0
    %v699 = vadd.f32 0.0, %v698
    %700 = vmatmul.bf16.gmra.mxu0 %v596
    %v701 = vpop.f32.mrf.mxu0
    %v702 = vadd.f32 0.0, %v701
    %v703 = vpop.f32.mrf.mxu0
    %v704 = vadd.f32 0.0, %v703
    %705 = vmatmul.bf16.gmra.mxu0 %v597
    %v706 = vpop.f32.mrf.mxu0
    %v707 = vadd.f32 0.0, %v706
    %v708 = vpop.f32.mrf.mxu0
    %v709 = vadd.f32 0.0, %v708
    %710 = vmatmul.bf16.gmra.mxu0 %v598
    %v711 = vpop.f32.mrf.mxu0
    %v712 = vadd.f32 0.0, %v711
    %v713 = vpop.f32.mrf.mxu0
    %v714 = vadd.f32 0.0, %v713
    %715 = vmatmul.bf16.gmra.mxu0 %v599
    %v716 = vpop.f32.mrf.mxu0
    %v717 = vadd.f32 0.0, %v716
    %v718 = vpop.f32.mrf.mxu0
    %v719 = vadd.f32 0.0, %v718
    %720 = vmatmul.bf16.gmra.mxu0 %v600
    %v721 = vpop.f32.mrf.mxu0
    %v722 = vadd.f32 0.0, %v721
    %v723 = vpop.f32.mrf.mxu0
    %v724 = vadd.f32 0.0, %v723
    %725 = vmatmul.bf16.gmra.mxu0 %v601
    %v726 = vpop.f32.mrf.mxu0
    %v727 = vadd.f32 0.0, %v726
    %v728 = vpop.f32.mrf.mxu0
    %v729 = vadd.f32 0.0, %v728
    %730 = vdwg.mxu0
    %731 = vmatpush.bf16.msra.mxu0 %v665
    %732 = vmatpush.bf16.msra.mxu0 %v663
    %733 = vmatpush.bf16.msra.mxu0 %v661
    %734 = vmatpush.bf16.msra.mxu0 %v659
    %735 = vmatpush.bf16.msra.mxu0 %v657
    %736 = vmatpush.bf16.msra.mxu0 %v655
    %737 = vmatpush.bf16.msra.mxu0 %v653
    %738 = vmatpush.bf16.msra.mxu0 %v651
    %739 = vmatmul.bf16.gmra.mxu0 %v594
    %v740 = vpop.f32.mrf.mxu0
    %v741 = vadd.f32 0.0, %v740
    %v742 = vpop.f32.mrf.mxu0
    %v743 = vadd.f32 0.0, %v742
    %744 = vmatmul.bf16.gmra.mxu0 %v595
    %v745 = vpop.f32.mrf.mxu0
    %v746 = vadd.f32 0.0, %v745
    %v747 = vpop.f32.mrf.mxu0
    %v748 = vadd.f32 0.0, %v747
    %749 = vmatmul.bf16.gmra.mxu0 %v596
    %v750 = vpop.f32.mrf.mxu0
    %v751 = vadd.f32 0.0, %v750
    %v752 = vpop.f32.mrf.mxu0
    %v753 = vadd.f32 0.0, %v752
    %754 = vmatmul.bf16.gmra.mxu0 %v597
    %v755 = vpop.f32.mrf.mxu0
    %v756 = vadd.f32 0.0, %v755
    %v757 = vpop.f32.mrf.mxu0
    %v758 = vadd.f32 0.0, %v757
    %759 = vmatmul.bf16.gmra.mxu0 %v598
    %v760 = vpop.f32.mrf.mxu0
    %v761 = vadd.f32 0.0, %v760
    %v762 = vpop.f32.mrf.mxu0
    %v763 = vadd.f32 0.0, %v762
    %764 = vmatmul.bf16.gmra.mxu0 %v599
    %v765 = vpop.f32.mrf.mxu0
    %v766 = vadd.f32 0.0, %v765
    %v767 = vpop.f32.mrf.mxu0
    %v768 = vadd.f32 0.0, %v767
    %769 = vmatmul.bf16.gmra.mxu0 %v600
    %v770 = vpop.f32.mrf.mxu0
    %v771 = vadd.f32 0.0, %v770
    %v772 = vpop.f32.mrf.mxu0
    %v773 = vadd.f32 0.0, %v772
    %774 = vmatmul.bf16.gmra.mxu0 %v601
    %v775 = vpop.f32.mrf.mxu0
    %v776 = vadd.f32 0.0, %v775
    %v777 = vpop.f32.mrf.mxu0
    %v778 = vadd.f32 0.0, %v777
    %779 = vdwg.mxu0
    %v780 = vpack.c.bf16 %v743, %v741
    %v781 = vpack.c.bf16 %v748, %v746
    %v782 = vpack.c.bf16 %v753, %v751
    %v783 = vpack.c.bf16 %v758, %v756
    %v784 = vpack.c.bf16 %v763, %v761
    %v785 = vpack.c.bf16 %v768, %v766
    %v786 = vpack.c.bf16 %v773, %v771
    %v787 = vpack.c.bf16 %v778, %v776
    %788 = vmatpush.bf16.msra.mxu0 %v787
    %789 = vmatpush.bf16.msra.mxu0 %v786
    %790 = vmatpush.bf16.msra.mxu0 %v785
    %791 = vmatpush.bf16.msra.mxu0 %v784
    %792 = vmatpush.bf16.msra.mxu0 %v783
    %793 = vmatpush.bf16.msra.mxu0 %v782
    %794 = vmatpush.bf16.msra.mxu0 %v781
    %795 = vmatpush.bf16.msra.mxu0 %v780
    %796 = vmatmul.bf16.gmra.mxu0 %v365
    %v797 = vpop.f32.mrf.mxu0
    %v798 = vadd.f32 0.0, %v797
    %v799 = vpop.f32.mrf.mxu0
    %v800 = vadd.f32 0.0, %v799
    %801 = vmatmul.bf16.gmra.mxu0 %v366
    %v802 = vpop.f32.mrf.mxu0
    %v803 = vadd.f32 0.0, %v802
    %v804 = vpop.f32.mrf.mxu0
    %v805 = vadd.f32 0.0, %v804
    %806 = vmatmul.bf16.gmra.mxu0 %v367
    %v807 = vpop.f32.mrf.mxu0
    %v808 = vadd.f32 0.0, %v807
    %v809 = vpop.f32.mrf.mxu0
    %v810 = vadd.f32 0.0, %v809
    %811 = vmatmul.bf16.gmra.mxu0 %v368
    %v812 = vpop.f32.mrf.mxu0
    %v813 = vadd.f32 0.0, %v812
    %v814 = vpop.f32.mrf.mxu0
    %v815 = vadd.f32 0.0, %v814
    %816 = vmatmul.bf16.gmra.mxu0 %v369
    %v817 = vpop.f32.mrf.mxu0
    %v818 = vadd.f32 0.0, %v817
    %v819 = vpop.f32.mrf.mxu0
    %v820 = vadd.f32 0.0, %v819
    %821 = vmatmul.bf16.gmra.mxu0 %v370
    %v822 = vpop.f32.mrf.mxu0
    %v823 = vadd.f32 0.0, %v822
    %v824 = vpop.f32.mrf.mxu0
    %v825 = vadd.f32 0.0, %v824
    %826 = vmatmul.bf16.gmra.mxu0 %v371
    %v827 = vpop.f32.mrf.mxu0
    %v828 = vadd.f32 0.0, %v827
    %v829 = vpop.f32.mrf.mxu0
    %v830 = vadd.f32 0.0, %v829
    %831 = vmatmul.bf16.gmra.mxu0 %v372
    %v832 = vpop.f32.mrf.mxu0
    %v833 = vadd.f32 0.0, %v832
    %v834 = vpop.f32.mrf.mxu0
    %v835 = vadd.f32 0.0, %v834
    %836 = vdwg.mxu0
    %v837 = vmul.f32 %v433, %v798
    %v838 = vmul.f32 %v438, %v800
    %v839 = vmul.f32 %v443, %v803
    %v840 = vmul.f32 %v448, %v805
    %v841 = vmul.f32 %v453, %v808
    %v842 = vmul.f32 %v458, %v810
    %v843 = vmul.f32 %v463, %v813
    %v844 = vmul.f32 %v468, %v815
    %v845 = vmul.f32 %v473, %v818
    %v846 = vmul.f32 %v478, %v820
    %v847 = vmul.f32 %v483, %v823
    %v848 = vmul.f32 %v488, %v825
    %v849 = vmul.f32 %v493, %v828
    %v850 = vmul.f32 %v498, %v830
    %v851 = vmul.f32 %v503, %v833
    %v852 = vmul.f32 %v508, %v835
    %v853 = vadd.f32 %v692, %v837
    %v854 = vadd.f32 %v694, %v838
    %v855 = vadd.f32 %v697, %v839
    %v856 = vadd.f32 %v699, %v840
    %v857 = vadd.f32 %v702, %v841
    %v858 = vadd.f32 %v704, %v842
    %v859 = vadd.f32 %v707, %v843
    %v860 = vadd.f32 %v709, %v844
    %v861 = vadd.f32 %v712, %v845
    %v862 = vadd.f32 %v714, %v846
    %v863 = vadd.f32 %v717, %v847
    %v864 = vadd.f32 %v719, %v848
    %v865 = vadd.f32 %v722, %v849
    %v866 = vadd.f32 %v724, %v850
    %v867 = vadd.f32 %v727, %v851
    %v868 = vadd.f32 %v729, %v852
    %v870 = vperm.slane %v593, 0
    %v872 = vadd.f32 %v853, %v870
    %v873 = vadd.f32 %v854, %v870
    %v874 = vadd.f32 %v855, %v870
    %v875 = vadd.f32 %v856, %v870
    %v876 = vadd.f32 %v857, %v870
    %v877 = vadd.f32 %v858, %v870
    %v878 = vadd.f32 %v859, %v870
    %v879 = vadd.f32 %v860, %v870
    %v880 = vadd.f32 %v861, %v870
    %v881 = vadd.f32 %v862, %v870
    %v882 = vadd.f32 %v863, %v870
    %v883 = vadd.f32 %v864, %v870
    %v884 = vadd.f32 %v865, %v870
    %v885 = vadd.f32 %v866, %v870
    %v886 = vadd.f32 %v867, %v870
    %v887 = vadd.f32 %v868, %v870
    %v888 = vlaneseq
    %v889 = vand.u32 %v888, 127
    %vm890 = vcmp.lt.s32.totalorder %v889, 8
    %v891 = vsel %vm890, %v872, -1e+30
    %v892 = vsel %vm890, %v873, -1e+30
    %v893 = vsel %vm890, %v874, -1e+30
    %v894 = vsel %vm890, %v875, -1e+30
    %v895 = vsel %vm890, %v876, -1e+30
    %v896 = vsel %vm890, %v877, -1e+30
    %v897 = vsel %vm890, %v878, -1e+30
    %v898 = vsel %vm890, %v879, -1e+30
    %v899 = vsel %vm890, %v880, -1e+30
    %v900 = vsel %vm890, %v881, -1e+30
    %v901 = vsel %vm890, %v882, -1e+30
    %v902 = vsel %vm890, %v883, -1e+30
    %v903 = vsel %vm890, %v884, -1e+30
    %v904 = vsel %vm890, %v885, -1e+30
    %v905 = vsel %vm890, %v886, -1e+30
    %v906 = vsel %vm890, %v887, -1e+30
    %907 = vmax.xlane.f32.xlu0 %v891
    %v908 = vpop.xlane.xlu0 %907
    %909 = vmax.xlane.f32.xlu0 %v892
    %v910 = vpop.xlane.xlu0 %909
    %911 = vmax.xlane.f32.xlu0 %v893
    %v912 = vpop.xlane.xlu0 %911
    %913 = vmax.xlane.f32.xlu0 %v894
    %v914 = vpop.xlane.xlu0 %913
    %915 = vmax.xlane.f32.xlu0 %v895
    %v916 = vpop.xlane.xlu0 %915
    %917 = vmax.xlane.f32.xlu0 %v896
    %v918 = vpop.xlane.xlu0 %917
    %919 = vmax.xlane.f32.xlu0 %v897
    %v920 = vpop.xlane.xlu0 %919
    %921 = vmax.xlane.f32.xlu0 %v898
    %v922 = vpop.xlane.xlu0 %921
    %923 = vmax.xlane.f32.xlu0 %v899
    %v924 = vpop.xlane.xlu0 %923
    %925 = vmax.xlane.f32.xlu0 %v900
    %v926 = vpop.xlane.xlu0 %925
    %927 = vmax.xlane.f32.xlu0 %v901
    %v928 = vpop.xlane.xlu0 %927
    %929 = vmax.xlane.f32.xlu0 %v902
    %v930 = vpop.xlane.xlu0 %929
    %931 = vmax.xlane.f32.xlu0 %v903
    %v932 = vpop.xlane.xlu0 %931
    %933 = vmax.xlane.f32.xlu0 %v904
    %v934 = vpop.xlane.xlu0 %933
    %935 = vmax.xlane.f32.xlu0 %v905
    %v936 = vpop.xlane.xlu0 %935
    %937 = vmax.xlane.f32.xlu0 %v906
    %v938 = vpop.xlane.xlu0 %937
    %v939 = vsub.f32 %v891, %v908
    %v940 = vsub.f32 %v892, %v910
    %v941 = vsub.f32 %v893, %v912
    %v942 = vsub.f32 %v894, %v914
    %v943 = vsub.f32 %v895, %v916
    %v944 = vsub.f32 %v896, %v918
    %v945 = vsub.f32 %v897, %v920
    %v946 = vsub.f32 %v898, %v922
    %v947 = vsub.f32 %v899, %v924
    %v948 = vsub.f32 %v900, %v926
    %v949 = vsub.f32 %v901, %v928
    %v950 = vsub.f32 %v902, %v930
    %v951 = vsub.f32 %v903, %v932
    %v952 = vsub.f32 %v904, %v934
    %v953 = vsub.f32 %v905, %v936
    %v954 = vsub.f32 %v906, %v938
    %v955 = vmul.f32 %v939, 1.442695
    %v956 = vpow.pop %v955
    %v957 = vmul.f32 %v940, 1.442695
    %v958 = vpow.pop %v957
    %v959 = vmul.f32 %v941, 1.442695
    %v960 = vpow.pop %v959
    %v961 = vmul.f32 %v942, 1.442695
    %v962 = vpow.pop %v961
    %v963 = vmul.f32 %v943, 1.442695
    %v964 = vpow.pop %v963
    %v965 = vmul.f32 %v944, 1.442695
    %v966 = vpow.pop %v965
    %v967 = vmul.f32 %v945, 1.442695
    %v968 = vpow.pop %v967
    %v969 = vmul.f32 %v946, 1.442695
    %v970 = vpow.pop %v969
    %v971 = vmul.f32 %v947, 1.442695
    %v972 = vpow.pop %v971
    %v973 = vmul.f32 %v948, 1.442695
    %v974 = vpow.pop %v973
    %v975 = vmul.f32 %v949, 1.442695
    %v976 = vpow.pop %v975
    %v977 = vmul.f32 %v950, 1.442695
    %v978 = vpow.pop %v977
    %v979 = vmul.f32 %v951, 1.442695
    %v980 = vpow.pop %v979
    %v981 = vmul.f32 %v952, 1.442695
    %v982 = vpow.pop %v981
    %v983 = vmul.f32 %v953, 1.442695
    %v984 = vpow.pop %v983
    %v985 = vmul.f32 %v954, 1.442695
    %v986 = vpow.pop %v985
    %987 = vadd.xlane.f32.xlu0 %v956
    %v988 = vpop.xlane.xlu0 %987
    %989 = vadd.xlane.f32.xlu0 %v958
    %v990 = vpop.xlane.xlu0 %989
    %991 = vadd.xlane.f32.xlu0 %v960
    %v992 = vpop.xlane.xlu0 %991
    %993 = vadd.xlane.f32.xlu0 %v962
    %v994 = vpop.xlane.xlu0 %993
    %995 = vadd.xlane.f32.xlu0 %v964
    %v996 = vpop.xlane.xlu0 %995
    %997 = vadd.xlane.f32.xlu0 %v966
    %v998 = vpop.xlane.xlu0 %997
    %999 = vadd.xlane.f32.xlu0 %v968
    %v1000 = vpop.xlane.xlu0 %999
    %1001 = vadd.xlane.f32.xlu0 %v970
    %v1002 = vpop.xlane.xlu0 %1001
    %1003 = vadd.xlane.f32.xlu0 %v972
    %v1004 = vpop.xlane.xlu0 %1003
    %1005 = vadd.xlane.f32.xlu0 %v974
    %v1006 = vpop.xlane.xlu0 %1005
    %1007 = vadd.xlane.f32.xlu0 %v976
    %v1008 = vpop.xlane.xlu0 %1007
    %1009 = vadd.xlane.f32.xlu0 %v978
    %v1010 = vpop.xlane.xlu0 %1009
    %1011 = vadd.xlane.f32.xlu0 %v980
    %v1012 = vpop.xlane.xlu0 %1011
    %1013 = vadd.xlane.f32.xlu0 %v982
    %v1014 = vpop.xlane.xlu0 %1013
    %1015 = vadd.xlane.f32.xlu0 %v984
    %v1016 = vpop.xlane.xlu0 %1015
    %1017 = vadd.xlane.f32.xlu0 %v986
    %v1018 = vpop.xlane.xlu0 %1017
    %v1019 = vlog2.pop %v988
    %v1020 = vmul.f32 %v1019, 0.6931472
    %v1021 = vlog2.pop %v990
    %v1022 = vmul.f32 %v1021, 0.6931472
    %v1023 = vlog2.pop %v992
    %v1024 = vmul.f32 %v1023, 0.6931472
    %v1025 = vlog2.pop %v994
    %v1026 = vmul.f32 %v1025, 0.6931472
    %v1027 = vlog2.pop %v996
    %v1028 = vmul.f32 %v1027, 0.6931472
    %v1029 = vlog2.pop %v998
    %v1030 = vmul.f32 %v1029, 0.6931472
    %v1031 = vlog2.pop %v1000
    %v1032 = vmul.f32 %v1031, 0.6931472
    %v1033 = vlog2.pop %v1002
    %v1034 = vmul.f32 %v1033, 0.6931472
    %v1035 = vlog2.pop %v1004
    %v1036 = vmul.f32 %v1035, 0.6931472
    %v1037 = vlog2.pop %v1006
    %v1038 = vmul.f32 %v1037, 0.6931472
    %v1039 = vlog2.pop %v1008
    %v1040 = vmul.f32 %v1039, 0.6931472
    %v1041 = vlog2.pop %v1010
    %v1042 = vmul.f32 %v1041, 0.6931472
    %v1043 = vlog2.pop %v1012
    %v1044 = vmul.f32 %v1043, 0.6931472
    %v1045 = vlog2.pop %v1014
    %v1046 = vmul.f32 %v1045, 0.6931472
    %v1047 = vlog2.pop %v1016
    %v1048 = vmul.f32 %v1047, 0.6931472
    %v1049 = vlog2.pop %v1018
    %v1050 = vmul.f32 %v1049, 0.6931472
    %v1051 = vsub.f32 %v939, %v1020
    %v1052 = vsub.f32 %v940, %v1022
    %v1053 = vsub.f32 %v941, %v1024
    %v1054 = vsub.f32 %v942, %v1026
    %v1055 = vsub.f32 %v943, %v1028
    %v1056 = vsub.f32 %v944, %v1030
    %v1057 = vsub.f32 %v945, %v1032
    %v1058 = vsub.f32 %v946, %v1034
    %v1059 = vsub.f32 %v947, %v1036
    %v1060 = vsub.f32 %v948, %v1038
    %v1061 = vsub.f32 %v949, %v1040
    %v1062 = vsub.f32 %v950, %v1042
    %v1063 = vsub.f32 %v951, %v1044
    %v1064 = vsub.f32 %v952, %v1046
    %v1065 = vsub.f32 %v953, %v1048
    %v1066 = vsub.f32 %v954, %v1050
    %1067 = vst [vmem:[#allocation8] sm:$0xff] %v1051
    %1068 = vst [vmem:[#allocation8 + $0x8] sm:$0xff] %v1052
    %1069 = vst [vmem:[#allocation8 + $0x10] sm:$0xff] %v1053
    %1070 = vst [vmem:[#allocation8 + $0x18] sm:$0xff] %v1054
    %1071 = vst [vmem:[#allocation8 + $0x20] sm:$0xff] %v1055
    %1072 = vst [vmem:[#allocation8 + $0x28] sm:$0xff] %v1056
    %1073 = vst [vmem:[#allocation8 + $0x30] sm:$0xff] %v1057
    %1074 = vst [vmem:[#allocation8 + $0x38] sm:$0xff] %v1058
    %1075 = vst [vmem:[#allocation8 + $0x40] sm:$0xff] %v1059
    %1076 = vst [vmem:[#allocation8 + $0x48] sm:$0xff] %v1060
    %1077 = vst [vmem:[#allocation8 + $0x50] sm:$0xff] %v1061
    %1078 = vst [vmem:[#allocation8 + $0x58] sm:$0xff] %v1062
    %1079 = vst [vmem:[#allocation8 + $0x60] sm:$0xff] %v1063
    %1080 = vst [vmem:[#allocation8 + $0x68] sm:$0xff] %v1064
    %1081 = vst [vmem:[#allocation8 + $0x70] sm:$0xff] %v1065
    %1082 = vst [vmem:[#allocation8 + $0x78] sm:$0xff] %v1066
    // Predicated region
    $region42: #{tpu_custom_call.1} parent=1 // pred_check
      _
    $region43: #{tpu_custom_call.1} parent=1 // pred_check_branch
      %1084 = sbr.rel (0) target = $region45
    $region44: #{tpu_custom_call.1} parent=1 // pred_region
      %1086 = vsyncadd [#allocation4], 0
      %s1087 = sshll.u32 [#allocation8], 4
      %s1088 = int_to_ptr.vmem [resolvable:$true] %s1087
      %s1089 = sshll.u32 %s7, 4
      %s1090 = int_to_ptr.hbm [resolvable:$true] %s1089
      %1095 = dma.vmem_to_hbm [thread:$0]  %s1088, 2048, %s1090, [#allocation4], 128, 128, 8
    $region45: #{tpu_custom_call.1} parent=1 // pred_fallthru
      _
    // Predicated region
    $region46: #{tpu_custom_call.1} parent=1 // pred_check
      _
    $region47: #{tpu_custom_call.1} parent=1 // pred_check_branch
      %1097 = sbr.rel (0) target = $region49
    $region48: #{tpu_custom_call.1} parent=1 // pred_region
      %1099 = dma.done [#allocation4], 2048
    $region49: #{tpu_custom_call.1} parent=1 // pred_fallthru
      _
    %1100 = vsyncpa [#allocation3], 1
    %1101 = vsyncpa [#allocation6], 1
    %1102 = vsyncpa [#allocation4], 1

</llo_original>
